<compile_context>
chip_gen: v7x
topology: tpu7x:2x2x1
jax: 0.10.0
libtpu: 0.0.40
codegen_flags: <defaults>
</compile_context>

<pallas_src>
import functools
import math

import jax
import jax.numpy as jnp
from jax.experimental import pallas as pl
from jax.experimental.pallas import tpu as pltpu

_LN_EPS = 1e-5
# Above the 32 MiB scoped default (per perf review) while staying under v7x's 64 MiB
# physical VMEM with headroom; the v6e/v5e 128 MiB parts are nowhere near this limit.
_VMEM_LIMIT = 48 * 1024 * 1024


def _cp(semantics):
    return pltpu.CompilerParams(dimension_semantics=semantics,
                                vmem_limit_bytes=_VMEM_LIMIT)


def _pick_row_tile(n, cap=1024):
    """Row (sublane) tile: a multiple-of-8 divisor of n up to cap, else the full extent."""
    if n <= cap:
        return n
    t = cap - cap % 8
    while t >= 8:
        if n % t == 0:
            return t
        t -= 8
    return n


# --------------------------------------------------------------------------- kernels
def _layernorm_f32(x, w, b):
    mu = jnp.mean(x, axis=-1, keepdims=True)
    var = jnp.mean(jnp.square(x - mu), axis=-1, keepdims=True)
    return (x - mu) * jax.lax.rsqrt(var + _LN_EPS) * w + b


def _ln_pos_qkv_kernel(x_ref, pos_ref, lnw_ref, lnb_ref,
                       wq_ref, bq_ref, wk_ref, bk_ref, wv_ref, bv_ref,
                       q_ref, k_ref, v_ref):
    # Self-attention input stage (queries == keys and q_pos == k_pos in the module's
    # self-attn Block): LN + pos add + all three projections in one pass.
    y = _layernorm_f32(x_ref[...].astype(jnp.float32), lnw_ref[...], lnb_ref[...])
    y = y + pos_ref[...].astype(jnp.float32)
    q_ref[...] = (jnp.dot(y, wq_ref[...], preferred_element_type=jnp.float32)
                  + bq_ref[...]).astype(q_ref.dtype)
    k_ref[...] = (jnp.dot(y, wk_ref[...], preferred_element_type=jnp.float32)
                  + bk_ref[...]).astype(k_ref.dtype)
    v_ref[...] = (jnp.dot(y, wv_ref[...], preferred_element_type=jnp.float32)
                  + bv_ref[...]).astype(v_ref.dtype)


def _ln_pos_q_kernel(x_ref, pos_ref, lnw_ref, lnb_ref, wq_ref, bq_ref, q_ref):
    # Cross-attention query stage: LN + pos add + Q projection.
    y = _layernorm_f32(x_ref[...].astype(jnp.float32), lnw_ref[...], lnb_ref[...])
    y = y + pos_ref[...].astype(jnp.float32)
    q_ref[...] = (jnp.dot(y, wq_ref[...], preferred_element_type=jnp.float32)
                  + bq_ref[...]).astype(q_ref.dtype)


def _pos_kv_kernel(x_ref, pos_ref, wk_ref, bk_ref, wv_ref, bv_ref, k_ref, v_ref):
    # Cross-attention key/value stage: pos add (no LayerNorm) + K/V projections.
    y = x_ref[...].astype(jnp.float32) + pos_ref[...].astype(jnp.float32)
    k_ref[...] = (jnp.dot(y, wk_ref[...], preferred_element_type=jnp.float32)
                  + bk_ref[...]).astype(k_ref.dtype)
    v_ref[...] = (jnp.dot(y, wv_ref[...], preferred_element_type=jnp.float32)
                  + bv_ref[...]).astype(v_ref.dtype)


def _attn_core_kernel(*refs, n_heads, dh, scale, inv_keep, has_dropout):
    # One grid step = one batch sample, all heads.  Head split/merge stays on the VMEM
    # tile; output is the full (Nq, D) slab.
    if has_dropout:
        q_ref, k_ref, v_ref, bias_ref, drop_ref, o_ref = refs
    else:
        q_ref, k_ref, v_ref, bias_ref, o_ref = refs
        drop_ref = None
    q = q_ref[0]                     # (Nq, D) native dtype -> MXU
    k = k_ref[0]                     # (Nk, D)
    v = v_ref[0]                     # (Nk, D)
    bias = bias_ref[0]               # (1, Nk) f32 key-padding bias, shared by all heads
    # TODO(synk): for long sequences, tile Nk with an online-softmax (flash-style)
    # accumulator so scores never exceed v7x's 64 MiB VMEM.
    for h in range(n_heads):
        sl = slice(h * dh, (h + 1) * dh)
        s = jax.lax.dot_general(q[:, sl], k[:, sl], (((1,), (1,)), ((), ())),
                                preferred_element_type=jnp.float32) * scale
        s = s + bias
        s = s - jnp.max(s, axis=-1, keepdims=True)
        p = jnp.exp(s)
        l = jnp.sum(p, axis=-1, keepdims=True)
        p = p * pl.reciprocal(l, approx=True)          # EUP slot; l >= 1 always
        if has_dropout:
            # int8 mask, 1/(1-p) scale applied in-kernel (post-softmax, no renorm —
            # matches nn.MultiheadAttention).
            p = p * (drop_ref[0, h].astype(jnp.float32) * inv_keep)
        o = jnp.dot(p.astype(v.dtype), v[:, sl], preferred_element_type=jnp.float32)
        o_ref[0, :, sl] = o.astype(o_ref.dtype)


def _attn_out_kernel(*refs, inv_keep, has_dropout, has_drop_path):
    # Output projection + dropout + drop-path + residual add, fused.
    rest = list(refs)
    attn_ref = rest.pop(0)
    wo_ref = rest.pop(0)
    bo_ref = rest.pop(0)
    res_ref = rest.pop(0)
    dmask_ref = rest.pop(0) if has_dropout else None
    dp_ref = rest.pop(0) if has_drop_path else None
    o_ref = rest.pop(0)
    y = jnp.dot(attn_ref[0], wo_ref[...], preferred_element_type=jnp.float32) + bo_ref[...]
    if has_dropout:
        y = y * (dmask_ref[0].astype(jnp.float32) * inv_keep)
    if has_drop_path:
        y = y * dp_ref[0]            # (1, 1) f32 per-sample factor, broadcast over (Nq, D)
    o_ref[0] = (res_ref[0].astype(jnp.float32) + y).astype(o_ref.dtype)


def _ffn_kernel(*refs, inv_keep, has_dropout, has_drop_path):
    # ffn_norm + Linear + ReLU + dropout + Linear + dropout + drop-path + residual, fused.
    rest = list(refs)
    x_ref = rest.pop(0)
    lnw_ref = rest.pop(0)
    lnb_ref = rest.pop(0)
    w1_ref = rest.pop(0)
    b1_ref = rest.pop(0)
    w2_ref = rest.pop(0)
    b2_ref = rest.pop(0)
    dm1_ref = rest.pop(0) if has_dropout else None
    dm2_ref = rest.pop(0) if has_dropout else None
    dp_ref = rest.pop(0) if has_drop_path else None
    o_ref = rest.pop(0)

    x = x_ref[0].astype(jnp.float32)                      # (Nq, D) residual input
    h = _layernorm_f32(x, lnw_ref[...], lnb_ref[...])
    h = jnp.dot(h, w1_ref[...], preferred_element_type=jnp.float32) + b1_ref[...]
    h = jnp.maximum(h, 0.0)
    if has_dropout:
        h = h * (dm1_ref[0].astype(jnp.float32) * inv_keep)
    h = jnp.dot(h, w2_ref[...], preferred_element_type=jnp.float32) + b2_ref[...]
    if has_dropout:
        h = h * (dm2_ref[0].astype(jnp.float32) * inv_keep)
    if has_drop_path:
        h = h * dp_ref[0]
    o_ref[0] = (x + h).astype(o_ref.dtype)


# --------------------------------------------------------------------------- wrappers
def _fused_qkv_self(x, pos, ln, pq, pk, pv):
    B, N, D = x.shape
    rows = B * N
    TR = _pick_row_tile(rows)
    row_spec = pl.BlockSpec((TR, D), lambda i: (i, 0))
    vec_spec = pl.BlockSpec((1, D), lambda i: (0, 0))
    mat_spec = pl.BlockSpec((D, D), lambda i: (0, 0))
    q, k, v = pl.pallas_call(
        _ln_pos_qkv_kernel,
        out_shape=[jax.ShapeDtypeStruct((rows, D), x.dtype)] * 3,
        grid=(rows // TR,),
        in_specs=[row_spec, row_spec, vec_spec, vec_spec,
                  mat_spec, vec_spec, mat_spec, vec_spec, mat_spec, vec_spec],
        out_specs=[row_spec] * 3,
        compiler_params=_cp(("parallel",)),
    )(x.reshape(rows, D), pos.reshape(rows, D), ln["w"], ln["b"],
      pq["w"], pq["b"], pk["w"], pk["b"], pv["w"], pv["b"])
    return q.reshape(B, N, D), k.reshape(B, N, D), v.reshape(B, N, D)


def _fused_q(x, pos, ln, pq):
    B, N, D = x.shape
    rows = B * N
    TR = _pick_row_tile(rows)
    row_spec = pl.BlockSpec((TR, D), lambda i: (i, 0))
    vec_spec = pl.BlockSpec((1, D), lambda i: (0, 0))
    mat_spec = pl.BlockSpec((D, D), lambda i: (0, 0))
    q = pl.pallas_call(
        _ln_pos_q_kernel,
        out_shape=jax.ShapeDtypeStruct((rows, D), x.dtype),
        grid=(rows // TR,),
        in_specs=[row_spec, row_spec, vec_spec, vec_spec, mat_spec, vec_spec],
        out_specs=row_spec,
        compiler_params=_cp(("parallel",)),
    )(x.reshape(rows, D), pos.reshape(rows, D), ln["w"], ln["b"], pq["w"], pq["b"])
    return q.reshape(B, N, D)


def _fused_kv(x, pos, pk, pv):
    B, N, D = x.shape
    rows = B * N
    TR = _pick_row_tile(rows)
    row_spec = pl.BlockSpec((TR, D), lambda i: (i, 0))
    vec_spec = pl.BlockSpec((1, D), lambda i: (0, 0))
    mat_spec = pl.BlockSpec((D, D), lambda i: (0, 0))
    k, v = pl.pallas_call(
        _pos_kv_kernel,
        out_shape=[jax.ShapeDtypeStruct((rows, D), x.dtype)] * 2,
        grid=(rows // TR,),
        in_specs=[row_spec, row_spec, mat_spec, vec_spec, mat_spec, vec_spec],
        out_specs=[row_spec] * 2,
        compiler_params=_cp(("parallel",)),
    )(x.reshape(rows, D), pos.reshape(rows, D), pk["w"], pk["b"], pv["w"], pv["b"])
    return k.reshape(B, N, D), v.reshape(B, N, D)


def _fused_attention(q, k, v, bias, drop_mask, *, n_heads, dropout_p):
    B, Nq, D = q.shape
    Nk = k.shape[1]
    dh = D // n_heads
    has_dropout = drop_mask is not None
    inv_keep = 1.0 / (1.0 - dropout_p) if has_dropout else 1.0
    in_specs = [pl.BlockSpec((1, Nq, D), lambda b: (b, 0, 0)),
                pl.BlockSpec((1, Nk, D), lambda b: (b, 0, 0)),
                pl.BlockSpec((1, Nk, D), lambda b: (b, 0, 0)),
                pl.BlockSpec((1, 1, Nk), lambda b: (b, 0, 0))]
    args = [q, k, v, bias]
    if has_dropout:
        in_specs.append(pl.BlockSpec((1, n_heads, Nq, Nk), lambda b: (b, 0, 0, 0)))
        args.append(drop_mask)
    return pl.pallas_call(
        functools.partial(_attn_core_kernel, n_heads=n_heads, dh=dh,
                          scale=1.0 / math.sqrt(dh), inv_keep=inv_keep,
                          has_dropout=has_dropout),
        out_shape=jax.ShapeDtypeStruct((B, Nq, D), q.dtype),
        grid=(B,),
        in_specs=in_specs,
        out_specs=pl.BlockSpec((1, Nq, D), lambda b: (b, 0, 0)),
        compiler_params=_cp(("parallel",)),
    )(*args)


def _fused_attn_out(attn, po, residual, dmask, dp_factor, *, dropout_p):
    B, Nq, D = attn.shape
    has_dropout = dmask is not None
    has_dp = dp_factor is not None
    inv_keep = 1.0 / (1.0 - dropout_p) if has_dropout else 1.0
    tile = pl.BlockSpec((1, Nq, D), lambda b: (b, 0, 0))
    in_specs = [tile,
                pl.BlockSpec((D, D), lambda b: (0, 0)),
                pl.BlockSpec((1, D), lambda b: (0, 0)),
                tile]
    args = [attn, po["w"], po["b"], residual]
    if has_dropout:
        in_specs.append(tile)
        args.append(dmask)
    if has_dp:
        in_specs.append(pl.BlockSpec((1, 1, 1), lambda b: (b, 0, 0)))
        args.append(dp_factor)
    return pl.pallas_call(
        functools.partial(_attn_out_kernel, inv_keep=inv_keep,
                          has_dropout=has_dropout, has_drop_path=has_dp),
        out_shape=jax.ShapeDtypeStruct((B, Nq, D), residual.dtype),
        grid=(B,),
        in_specs=in_specs,
        out_specs=tile,
        compiler_params=_cp(("parallel",)),
    )(*args)


def _fused_ffn(x, p, dm1, dm2, dp_factor, *, dropout_p):
    # TODO(synk): for large dim_feedforward, tile the Dff axis with an accumulator
    # (pl.when init on k==0) instead of keeping the full (D,Dff)/(Dff,D) weights resident.
    B, Nq, D = x.shape
    Dff = p["ffn1"]["w"].shape[1]
    has_dropout = dm1 is not None
    has_dp = dp_factor is not None
    inv_keep = 1.0 / (1.0 - dropout_p) if has_dropout else 1.0
    tile = pl.BlockSpec((1, Nq, D), lambda b: (b, 0, 0))
    in_specs = [tile,
                pl.BlockSpec((1, D), lambda b: (0, 0)),
                pl.BlockSpec((1, D), lambda b: (0, 0)),
                pl.BlockSpec((D, Dff), lambda b: (0, 0)),
                pl.BlockSpec((1, Dff), lambda b: (0, 0)),
                pl.BlockSpec((Dff, D), lambda b: (0, 0)),
                pl.BlockSpec((1, D), lambda b: (0, 0))]
    args = [x, p["ffn_norm"]["w"], p["ffn_norm"]["b"],
            p["ffn1"]["w"], p["ffn1"]["b"], p["ffn2"]["w"], p["ffn2"]["b"]]
    if has_dropout:
        in_specs.append(pl.BlockSpec((1, Nq, Dff), lambda b: (b, 0, 0)))
        args.append(dm1)
        in_specs.append(tile)
        args.append(dm2)
    if has_dp:
        in_specs.append(pl.BlockSpec((1, 1, 1), lambda b: (b, 0, 0)))
        args.append(dp_factor)
    return pl.pallas_call(
        functools.partial(_ffn_kernel, inv_keep=inv_keep,
                          has_dropout=has_dropout, has_drop_path=has_dp),
        out_shape=jax.ShapeDtypeStruct((B, Nq, D), x.dtype),
        grid=(B,),
        in_specs=in_specs,
        out_specs=tile,
        compiler_params=_cp(("parallel",)),
    )(*args)


# --------------------------------------------------------------------------- reference path
def _block_ref(p, queries, q_pos, keys, k_pos, bias, masks, dp0, dp1, *,
               n_heads, dropout_p, is_self_attn):
    def ln(x, prm):
        xf = x.astype(jnp.float32)
        mu = jnp.mean(xf, -1, keepdims=True)
        var = jnp.mean(jnp.square(xf - mu), -1, keepdims=True)
        return (xf - mu) * jax.lax.rsqrt(var + _LN_EPS) * prm["w"][0] + prm["b"][0]

    def lin(x, prm):
        return jnp.dot(x, prm["w"], preferred_element_type=jnp.float32) + prm["b"][0]

    inv_keep = 1.0 / (1.0 - dropout_p) if masks is not None else 1.0
    nq = ln(queries, p["query_norm"]) + q_pos
    nk = nq if is_self_attn else keys.astype(jnp.float32) + k_pos
    q, k, v = lin(nq, p["attn"]["q"]), lin(nk, p["attn"]["k"]), lin(nk, p["attn"]["v"])

    B, Nq, D = q.shape
    Nk = k.shape[1]
    dh = D // n_heads
    qh = q.reshape(B, Nq, n_heads, dh).transpose(0, 2, 1, 3)
    kh = k.reshape(B, Nk, n_heads, dh).transpose(0, 2, 1, 3)
    vh = v.reshape(B, Nk, n_heads, dh).transpose(0, 2, 1, 3)
    s = jnp.einsum("bhqd,bhkd->bhqk", qh, kh) / math.sqrt(dh) + bias[:, :, None, :]
    s = s - jnp.max(s, -1, keepdims=True)
    pw = jnp.exp(s)
    pw = pw / jnp.sum(pw, -1, keepdims=True)
    if masks is not None:
        pw = pw * masks["attn"].astype(jnp.float32) * inv_keep
    o = jnp.einsum("bhqk,bhkd->bhqd", pw, vh)
    o = o.transpose(0, 2, 1, 3).reshape(B, Nq, D)
    o = lin(o, p["attn"]["o"])
    if masks is not None:
        o = o * masks["proj"].astype(jnp.float32) * inv_keep
    if dp0 is not None:
        o = o * dp0
    x = queries.astype(jnp.float32) + o

    h = ln(x, p["ffn_norm"])
    h = jnp.maximum(lin(h, p["ffn1"]), 0.0)
    if masks is not None:
        h = h * masks["ffn1"].astype(jnp.float32) * inv_keep
    h = lin(h, p["ffn2"])
    if masks is not None:
        h = h * masks["ffn2"].astype(jnp.float32) * inv_keep
    if dp1 is not None:
        h = h * dp1
    return (x + h).astype(queries.dtype)


# --------------------------------------------------------------------------- block / module
def block_forward(p, queries, q_pos, keys, k_pos, mask, *, n_heads, dropout_p, drop_path_p,
                  is_self_attn, training, rng, use_pallas):
    B, Nq, D = queries.shape
    Nk = keys.shape[1]
    Dff = p["ffn1"]["w"].shape[1]

    use_dropout = training and dropout_p > 0.0
    use_dp = training and drop_path_p > 0.0

    masks = None
    dp0 = dp1 = None
    if training:
        r_attn, r_proj, r_f1, r_f2, r_dp0, r_dp1 = jax.random.split(rng, 6)
        if use_dropout:
            keep = 1.0 - dropout_p
            masks = {
                "attn": jax.random.bernoulli(r_attn, keep, (B, n_heads, Nq, Nk)).astype(jnp.int8),
                "proj": jax.random.bernoulli(r_proj, keep, (B, Nq, D)).astype(jnp.int8),
                "ffn1": jax.random.bernoulli(r_f1, keep, (B, Nq, Dff)).astype(jnp.int8),
                "ffn2": jax.random.bernoulli(r_f2, keep, (B, Nq, D)).astype(jnp.int8),
            }
        if use_dp:
            keep_prob = 1.0 - drop_path_p
            dp_scale = (1.0 / keep_prob) if keep_prob > 0.0 else 1.0   # scale_by_keep=True
            dp0 = jax.random.bernoulli(r_dp0, keep_prob, (B, 1, 1)).astype(jnp.float32) * dp_scale
            dp1 = jax.random.bernoulli(r_dp1, keep_prob, (B, 1, 1)).astype(jnp.float32) * dp_scale

    # Key-padding bias, kept at (B, 1, Nk) and reused by every head inside the kernel.
    bias = jnp.where(mask, -1e9, 0.0).astype(jnp.float32).reshape(B, 1, Nk)

    if not use_pallas:
        return _block_ref(p, queries, q_pos, keys, k_pos, bias, masks, dp0, dp1,
                          n_heads=n_heads, dropout_p=dropout_p, is_self_attn=is_self_attn)

    if is_self_attn:
        # The module's self-attention Block always passes keys == queries and
        # k_pos == q_pos, so a single fused LN+pos+QKV kernel feeds all three streams.
        q, k, v = _fused_qkv_self(queries, q_pos, p["query_norm"],
                                  p["attn"]["q"], p["attn"]["k"], p["attn"]["v"])
    else:
        q = _fused_q(queries, q_pos, p["query_norm"], p["attn"]["q"])
        k, v = _fused_kv(keys, k_pos, p["attn"]["k"], p["attn"]["v"])

    attn = _fused_attention(q, k, v, bias, masks["attn"] if masks else None,
                            n_heads=n_heads, dropout_p=dropout_p)
    queries = _fused_attn_out(attn, p["attn"]["o"], queries,
                              masks["proj"] if masks else None, dp0, dropout_p=dropout_p)
    queries = _fused_ffn(queries, p,
                         masks["ffn1"] if masks else None,
                         masks["ffn2"] if masks else None,
                         dp1, dropout_p=dropout_p)
    return queries


def _init_dense(key, din, dout, w_scale=0.02):
    kw, kb = jax.random.split(key)
    return {"w": w_scale * jax.random.normal(kw, (din, dout), jnp.float32),
            "b": w_scale * jax.random.normal(kb, (1, dout), jnp.float32)}


def _init_layernorm(d):
    return {"w": jnp.ones((1, d), jnp.float32), "b": jnp.zeros((1, d), jnp.float32)}


def _init_block(key, d_model, dim_feedforward):
    ks = jax.random.split(key, 6)
    return {
        "attn": {"q": _init_dense(ks[0], d_model, d_model),
                 "k": _init_dense(ks[1], d_model, d_model),
                 "v": _init_dense(ks[2], d_model, d_model),
                 "o": _init_dense(ks[3], d_model, d_model)},
        "query_norm": _init_layernorm(d_model),
        # keys_norm exists in the PyTorch module but is never used in Block.forward
        # (self-attn keys are normalized with query_norm there too); kept for parity.
        "keys_norm": _init_layernorm(d_model),
        "ffn_norm": _init_layernorm(d_model),
        "ffn1": _init_dense(ks[4], d_model, dim_feedforward),
        "ffn2": _init_dense(ks[5], dim_feedforward, d_model),
    }


class TransformerModulePallas:
    """JAX/Pallas mirror of TransformerModule.forward (locate_3d_decoder)."""

    def __init__(self, d_model, n_heads, dim_feedforward, dropout, drop_path,
                 use_checkpointing, *, key):
        self.n_heads = n_heads
        self.dropout_p = float(dropout)
        self.drop_path_p = float(drop_path)
        # TODO(synk): torch.utils.checkpoint only changes backward-pass memory; the forward
        # pass is unchanged, so checkpointing is a no-op here (jax.checkpoint is its analog).
        self.use_checkpointing = use_checkpointing
        self.training = False
        k1, k2, k3 = jax.random.split(key, 3)
        self.params = {
            "query_self_attn": _init_block(k1, d_model, dim_feedforward),
            "query_ptc_feat_attn": _init_block(k2, d_model, dim_feedforward),
            "ptc_feat_query_attn": _init_block(k3, d_model, dim_feedforward),
        }

    def __call__(self, query_feats, query_pos_embed, text_feats, text_pos_embed,
                 ptc_feats, ptc_pos_embed, query_mask, ptc_mask, *, rng=None,
                 use_pallas=True):
        training = self.training
        if training:
            rng = jax.random.PRNGKey(0) if rng is None else rng
            r1, r2, r3 = jax.random.split(rng, 3)
        else:
            r1 = r2 = r3 = None
        common = dict(n_heads=self.n_heads, dropout_p=self.dropout_p,
                      drop_path_p=self.drop_path_p, training=training,
                      use_pallas=use_pallas)

        n_text = text_feats.shape[1]
        query_feats = jnp.concatenate([query_feats, text_feats], axis=1)
        query_pos = jnp.concatenate([query_pos_embed, text_pos_embed], axis=1)

        query_feats = block_forward(self.params["query_self_attn"], query_feats, query_pos,
                                    query_feats, query_pos, query_mask,
                                    is_self_attn=True, rng=r1, **common)
        query_feats = block_forward(self.params["query_ptc_feat_attn"], query_feats, query_pos,
                                    ptc_feats, ptc_pos_embed, ptc_mask,
                                    is_self_attn=False, rng=r2, **common)
        ptc_feats = block_forward(self.params["ptc_feat_query_attn"], ptc_feats, ptc_pos_embed,
                                  query_feats, query_pos, query_mask,
                                  is_self_attn=False, rng=r3, **common)

        text_feats = query_feats[:, -n_text:]
        query_feats = query_feats[:, :-n_text]
        return query_feats, text_feats, ptc_feats


# --------------------------------------------------------------------------- self-test
if __name__ == "__main__":
    d_model, n_heads, dim_feedforward = 32, 4, 64
    B, n_query, n_text, n_ptc = 2, 8, 4, 16

    root = jax.random.PRNGKey(0)
    (k_param, k_q, k_qp, k_t, k_tp, k_p, k_pp, k_train) = jax.random.split(root, 8)

    module = TransformerModulePallas(d_model, n_heads, dim_feedforward,
                                     dropout=0.1, drop_path=0.2,
                                     use_checkpointing=False, key=k_param)

    query_feats = jax.random.normal(k_q, (B, n_query, d_model), jnp.float32)
    query_pos = 0.1 * jax.random.normal(k_qp, (B, n_query, d_model), jnp.float32)
    text_feats = jax.random.normal(k_t, (B, n_text, d_model), jnp.float32)
    text_pos = 0.1 * jax.random.normal(k_tp, (B, n_text, d_model), jnp.float32)
    ptc_feats = jax.random.normal(k_p, (B, n_ptc, d_model), jnp.float32)
    ptc_pos = 0.1 * jax.random.normal(k_pp, (B, n_ptc, d_model), jnp.float32)
    query_mask = jnp.zeros((B, n_query + n_text), dtype=bool).at[1, -2:].set(True)
    ptc_mask = jnp.zeros((B, n_ptc), dtype=bool).at[0, -3:].set(True)

    args = (query_feats, query_pos, text_feats, text_pos,
            ptc_feats, ptc_pos, query_mask, ptc_mask)

    ok = True
    expect_shapes = ((B, n_query, d_model), (B, n_text, d_model), (B, n_ptc, d_model))

    # 1) eval mode: fused Pallas kernels vs. the pure-jnp reference path.
    module.training = False
    out_pallas = jax.block_until_ready(module(*args, use_pallas=True))
    out_ref = jax.block_until_ready(module(*args, use_pallas=False))
    for a, b, shp in zip(out_pallas, out_ref, expect_shapes):
        ok &= (a.shape == shp and b.shape == shp)
        ok &= bool(jnp.all(jnp.isfinite(a)))
        ok &= bool(jnp.allclose(a, b, atol=2e-2, rtol=2e-2))

    # 2) training mode: dropout + drop-path randomness is drawn in the wrapper from the
    #    same rng for both paths, so Pallas and the reference must still agree.
    module.training = True
    out_train = jax.block_until_ready(module(*args, rng=k_train, use_pallas=True))
    out_train_ref = jax.block_until_ready(module(*args, rng=k_train, use_pallas=False))
    for a, b, shp in zip(out_train, out_train_ref, expect_shapes):
        ok &= (a.shape == shp)
        ok &= bool(jnp.all(jnp.isfinite(a)))
        ok &= bool(jnp.allclose(a, b, atol=2e-2, rtol=2e-2))

    print("KERNEL_OK" if ok else "KERNEL_MISMATCH")
</pallas_src>

<mosaic_0001>
module attributes {stable_mosaic.version = 11 : i64} {
  func.func @_ln_pos_qkv_kernel(%arg0: i32, %arg1: memref<24x32xf32, #tpu.memory_space<vmem>>, %arg2: memref<24x32xf32, #tpu.memory_space<vmem>>, %arg3: memref<1x32xf32, #tpu.memory_space<vmem>>, %arg4: memref<1x32xf32, #tpu.memory_space<vmem>>, %arg5: memref<32x32xf32, #tpu.memory_space<vmem>>, %arg6: memref<1x32xf32, #tpu.memory_space<vmem>>, %arg7: memref<32x32xf32, #tpu.memory_space<vmem>>, %arg8: memref<1x32xf32, #tpu.memory_space<vmem>>, %arg9: memref<32x32xf32, #tpu.memory_space<vmem>>, %arg10: memref<1x32xf32, #tpu.memory_space<vmem>>, %arg11: memref<24x32xf32, #tpu.memory_space<vmem>>, %arg12: memref<24x32xf32, #tpu.memory_space<vmem>>, %arg13: memref<24x32xf32, #tpu.memory_space<vmem>>) attributes {dimension_semantics = [#tpu.dimension_semantics<parallel>], iteration_bounds = array<i64: 1>, scalar_prefetch = 0 : i64, scratch_operands = 0 : i64, tpu.core_type = #tpu.core_type<tc>, window_params = [{transform_indices = @transform_0, window_bounds = array<i64: 24, 32>}, {transform_indices = @transform_1, window_bounds = array<i64: 24, 32>}, {pipeline_mode = #tpu.pipeline_mode<synchronous>, transform_indices = @transform_2, window_bounds = array<i64: 1, 32>}, {pipeline_mode = #tpu.pipeline_mode<synchronous>, transform_indices = @transform_3, window_bounds = array<i64: 1, 32>}, {pipeline_mode = #tpu.pipeline_mode<synchronous>, transform_indices = @transform_4, window_bounds = array<i64: 32, 32>}, {pipeline_mode = #tpu.pipeline_mode<synchronous>, transform_indices = @transform_5, window_bounds = array<i64: 1, 32>}, {pipeline_mode = #tpu.pipeline_mode<synchronous>, transform_indices = @transform_6, window_bounds = array<i64: 32, 32>}, {pipeline_mode = #tpu.pipeline_mode<synchronous>, transform_indices = @transform_7, window_bounds = array<i64: 1, 32>}, {pipeline_mode = #tpu.pipeline_mode<synchronous>, transform_indices = @transform_8, window_bounds = array<i64: 32, 32>}, {pipeline_mode = #tpu.pipeline_mode<synchronous>, transform_indices = @transform_9, window_bounds = array<i64: 1, 32>}, {transform_indices = @transform_10, window_bounds = array<i64: 24, 32>}, {transform_indices = @transform_11, window_bounds = array<i64: 24, 32>}, {transform_indices = @transform_12, window_bounds = array<i64: 24, 32>}]} {
    %c0 = arith.constant 0 : index
    %c0_0 = arith.constant 0 : index
    %0 = vector.load %arg1[%c0, %c0_0] : memref<24x32xf32, #tpu.memory_space<vmem>>, vector<24x32xf32>
    %c0_1 = arith.constant 0 : index
    %c0_2 = arith.constant 0 : index
    %1 = vector.load %arg3[%c0_1, %c0_2] : memref<1x32xf32, #tpu.memory_space<vmem>>, vector<1x32xf32>
    %c0_3 = arith.constant 0 : index
    %c0_4 = arith.constant 0 : index
    %2 = vector.load %arg4[%c0_3, %c0_4] : memref<1x32xf32, #tpu.memory_space<vmem>>, vector<1x32xf32>
    %cst = arith.constant dense<0.000000e+00> : vector<24xf32>
    %3 = vector.multi_reduction <add>, %0, %cst [1] : vector<24x32xf32> to vector<24xf32>
    %4 = vector.shape_cast %3 : vector<24xf32> to vector<24x1xf32>
    %cst_5 = arith.constant 3.200000e+01 : f32
    %5 = vector.broadcast %cst_5 : f32 to vector<24x1xf32>
    %6 = arith.divf %4, %5 : vector<24x1xf32>
    %7 = vector.broadcast %6 : vector<24x1xf32> to vector<24x32xf32>
    %8 = arith.subf %0, %7 : vector<24x32xf32>
    %9 = arith.mulf %8, %8 : vector<24x32xf32>
    %cst_6 = arith.constant dense<0.000000e+00> : vector<24xf32>
    %10 = vector.multi_reduction <add>, %9, %cst_6 [1] : vector<24x32xf32> to vector<24xf32>
    %11 = vector.shape_cast %10 : vector<24xf32> to vector<24x1xf32>
    %cst_7 = arith.constant 3.200000e+01 : f32
    %12 = vector.broadcast %cst_7 : f32 to vector<24x1xf32>
    %13 = arith.divf %11, %12 : vector<24x1xf32>
    %14 = vector.broadcast %6 : vector<24x1xf32> to vector<24x32xf32>
    %15 = arith.subf %0, %14 : vector<24x32xf32>
    %cst_8 = arith.constant 9.99999974E-6 : f32
    %16 = vector.broadcast %cst_8 : f32 to vector<24x1xf32>
    %17 = arith.addf %13, %16 : vector<24x1xf32>
    %18 = math.rsqrt %17 : vector<24x1xf32>
    %19 = vector.broadcast %18 : vector<24x1xf32> to vector<24x32xf32>
    %20 = arith.mulf %15, %19 : vector<24x32xf32>
    %21 = vector.broadcast %1 : vector<1x32xf32> to vector<24x32xf32>
    %22 = arith.mulf %20, %21 : vector<24x32xf32>
    %23 = vector.broadcast %2 : vector<1x32xf32> to vector<24x32xf32>
    %24 = arith.addf %22, %23 : vector<24x32xf32>
    %c0_9 = arith.constant 0 : index
    %c0_10 = arith.constant 0 : index
    %25 = vector.load %arg2[%c0_9, %c0_10] : memref<24x32xf32, #tpu.memory_space<vmem>>, vector<24x32xf32>
    %26 = arith.addf %24, %25 : vector<24x32xf32>
    %c0_11 = arith.constant 0 : index
    %c0_12 = arith.constant 0 : index
    %27 = vector.load %arg5[%c0_11, %c0_12] : memref<32x32xf32, #tpu.memory_space<vmem>>, vector<32x32xf32>
    %cst_13 = arith.constant dense<0.000000e+00> : vector<24x32xf32>
    %28 = tpu.matmul %26, %27, %cst_13 {dimension_numbers = #tpu.dot_dimension_numbers<[1], [0], [0], [1], [0, 0, 1, 1], [], []>} : vector<24x32xf32>, vector<32x32xf32>, vector<24x32xf32> -> vector<24x32xf32>
    %c0_14 = arith.constant 0 : index
    %c0_15 = arith.constant 0 : index
    %29 = vector.load %arg6[%c0_14, %c0_15] : memref<1x32xf32, #tpu.memory_space<vmem>>, vector<1x32xf32>
    %30 = vector.broadcast %29 : vector<1x32xf32> to vector<24x32xf32>
    %31 = arith.addf %28, %30 : vector<24x32xf32>
    %c0_16 = arith.constant 0 : index
    %c0_17 = arith.constant 0 : index
    %32 = vector.load %arg11[%c0_16, %c0_17] : memref<24x32xf32, #tpu.memory_space<vmem>>, vector<24x32xf32>
    tpu.vector_store %arg11[%c0_16, %c0_17], %31 {strides = array<i32>} : memref<24x32xf32, #tpu.memory_space<vmem>>, vector<24x32xf32>,
    %c0_18 = arith.constant 0 : index
    %c0_19 = arith.constant 0 : index
    %33 = vector.load %arg7[%c0_18, %c0_19] : memref<32x32xf32, #tpu.memory_space<vmem>>, vector<32x32xf32>
    %cst_20 = arith.constant dense<0.000000e+00> : vector<24x32xf32>
    %34 = tpu.matmul %26, %33, %cst_20 {dimension_numbers = #tpu.dot_dimension_numbers<[1], [0], [0], [1], [0, 0, 1, 1], [], []>} : vector<24x32xf32>, vector<32x32xf32>, vector<24x32xf32> -> vector<24x32xf32>
    %c0_21 = arith.constant 0 : index
    %c0_22 = arith.constant 0 : index
    %35 = vector.load %arg8[%c0_21, %c0_22] : memref<1x32xf32, #tpu.memory_space<vmem>>, vector<1x32xf32>
    %36 = vector.broadcast %35 : vector<1x32xf32> to vector<24x32xf32>
    %37 = arith.addf %34, %36 : vector<24x32xf32>
    %c0_23 = arith.constant 0 : index
    %c0_24 = arith.constant 0 : index
    %38 = vector.load %arg12[%c0_23, %c0_24] : memref<24x32xf32, #tpu.memory_space<vmem>>, vector<24x32xf32>
    tpu.vector_store %arg12[%c0_23, %c0_24], %37 {strides = array<i32>} : memref<24x32xf32, #tpu.memory_space<vmem>>, vector<24x32xf32>,
    %c0_25 = arith.constant 0 : index
    %c0_26 = arith.constant 0 : index
    %39 = vector.load %arg9[%c0_25, %c0_26] : memref<32x32xf32, #tpu.memory_space<vmem>>, vector<32x32xf32>
    %cst_27 = arith.constant dense<0.000000e+00> : vector<24x32xf32>
    %40 = tpu.matmul %26, %39, %cst_27 {dimension_numbers = #tpu.dot_dimension_numbers<[1], [0], [0], [1], [0, 0, 1, 1], [], []>} : vector<24x32xf32>, vector<32x32xf32>, vector<24x32xf32> -> vector<24x32xf32>
    %c0_28 = arith.constant 0 : index
    %c0_29 = arith.constant 0 : index
    %41 = vector.load %arg10[%c0_28, %c0_29] : memref<1x32xf32, #tpu.memory_space<vmem>>, vector<1x32xf32>
    %42 = vector.broadcast %41 : vector<1x32xf32> to vector<24x32xf32>
    %43 = arith.addf %40, %42 : vector<24x32xf32>
    %c0_30 = arith.constant 0 : index
    %c0_31 = arith.constant 0 : index
    %44 = vector.load %arg13[%c0_30, %c0_31] : memref<24x32xf32, #tpu.memory_space<vmem>>, vector<24x32xf32>
    tpu.vector_store %arg13[%c0_30, %c0_31], %43 {strides = array<i32>} : memref<24x32xf32, #tpu.memory_space<vmem>>, vector<24x32xf32>,
    return
  }
  func.func @transform_0(%arg0: i32) -> (i32, i32) {
    %c0_i32 = arith.constant 0 : i32
    %c0_i32_0 = arith.constant 0 : i32
    return %arg0, %c0_i32 : i32, i32
  }
  func.func @transform_1(%arg0: i32) -> (i32, i32) {
    %c0_i32 = arith.constant 0 : i32
    %c0_i32_0 = arith.constant 0 : i32
    return %arg0, %c0_i32 : i32, i32
  }
  func.func @transform_2(%arg0: i32) -> (i32, i32) {
    %c0_i32 = arith.constant 0 : i32
    %c0_i32_0 = arith.constant 0 : i32
    %c0_i32_1 = arith.constant 0 : i32
    return %c0_i32, %c0_i32_0 : i32, i32
  }
  func.func @transform_3(%arg0: i32) -> (i32, i32) {
    %c0_i32 = arith.constant 0 : i32
    %c0_i32_0 = arith.constant 0 : i32
    %c0_i32_1 = arith.constant 0 : i32
    return %c0_i32, %c0_i32_0 : i32, i32
  }
  func.func @transform_4(%arg0: i32) -> (i32, i32) {
    %c0_i32 = arith.constant 0 : i32
    %c0_i32_0 = arith.constant 0 : i32
    %c0_i32_1 = arith.constant 0 : i32
    return %c0_i32, %c0_i32_0 : i32, i32
  }
  func.func @transform_5(%arg0: i32) -> (i32, i32) {
    %c0_i32 = arith.constant 0 : i32
    %c0_i32_0 = arith.constant 0 : i32
    %c0_i32_1 = arith.constant 0 : i32
    return %c0_i32, %c0_i32_0 : i32, i32
  }
  func.func @transform_6(%arg0: i32) -> (i32, i32) {
    %c0_i32 = arith.constant 0 : i32
    %c0_i32_0 = arith.constant 0 : i32
    %c0_i32_1 = arith.constant 0 : i32
    return %c0_i32, %c0_i32_0 : i32, i32
  }
  func.func @transform_7(%arg0: i32) -> (i32, i32) {
    %c0_i32 = arith.constant 0 : i32
    %c0_i32_0 = arith.constant 0 : i32
    %c0_i32_1 = arith.constant 0 : i32
    return %c0_i32, %c0_i32_0 : i32, i32
  }
  func.func @transform_8(%arg0: i32) -> (i32, i32) {
    %c0_i32 = arith.constant 0 : i32
    %c0_i32_0 = arith.constant 0 : i32
    %c0_i32_1 = arith.constant 0 : i32
    return %c0_i32, %c0_i32_0 : i32, i32
  }
  func.func @transform_9(%arg0: i32) -> (i32, i32) {
    %c0_i32 = arith.constant 0 : i32
    %c0_i32_0 = arith.constant 0 : i32
    %c0_i32_1 = arith.constant 0 : i32
    return %c0_i32, %c0_i32_0 : i32, i32
  }
  func.func @transform_10(%arg0: i32) -> (i32, i32) {
    %c0_i32 = arith.constant 0 : i32
    %c0_i32_0 = arith.constant 0 : i32
    return %arg0, %c0_i32 : i32, i32
  }
  func.func @transform_11(%arg0: i32) -> (i32, i32) {
    %c0_i32 = arith.constant 0 : i32
    %c0_i32_0 = arith.constant 0 : i32
    return %arg0, %c0_i32 : i32, i32
  }
  func.func @transform_12(%arg0: i32) -> (i32, i32) {
    %c0_i32 = arith.constant 0 : i32
    %c0_i32_0 = arith.constant 0 : i32
    return %arg0, %c0_i32 : i32, i32
  }
}

</mosaic_0001>

<llo_original>
// kernel: tpu_custom_call.1
$region0: #{tpu_custom_call.1}
  #allocation0 [shape = 'u32[]', space=smem, size = 0x4, offset = 0x4, fixed_abs, tag = 'smem constant byte address 0x4 - core index']
  #allocation1 [shape = 'u32[144,128]{1,0:T(1,128)}', space=vmem, size = 0x12000, scoped, tag = 'internal scratch']
  %s0 = inlined_call_operand.hbm [shape: f32[24,32], index: 0, kind: input, shape index: {}]
  %s1 = inlined_call_operand.hbm [shape: f32[24,32], index: 1, kind: input, shape index: {}]
  %s2 = inlined_call_operand.vmem [shape: f32[1,32], index: 2, kind: input, shape index: {}]
  %s3 = inlined_call_operand.vmem [shape: f32[1,32], index: 3, kind: input, shape index: {}]
  %s4 = inlined_call_operand.hbm [shape: f32[32,32], index: 4, kind: input, shape index: {}]
  %s5 = inlined_call_operand.vmem [shape: f32[1,32], index: 5, kind: input, shape index: {}]
  %s6 = inlined_call_operand.hbm [shape: f32[32,32], index: 6, kind: input, shape index: {}]
  %s7 = inlined_call_operand.vmem [shape: f32[1,32], index: 7, kind: input, shape index: {}]
  %s8 = inlined_call_operand.hbm [shape: f32[32,32], index: 8, kind: input, shape index: {}]
  %s9 = inlined_call_operand.vmem [shape: f32[1,32], index: 9, kind: input, shape index: {}]
  %s10 = inlined_call_operand.hbm [shape: f32[24,32], index: 10, kind: output, shape index: {0}]
  %s11 = inlined_call_operand.hbm [shape: f32[24,32], index: 11, kind: output, shape index: {1}]
  %s12 = inlined_call_operand.hbm [shape: f32[24,32], index: 12, kind: output, shape index: {2}]
  %13 = xla_tuple %s10, %s11, %s12
  %s14 = sld [smem:[#allocation0]]
  $region86: #{tpu_custom_call.1} parent=0
    _
  %s16 = ssub.s32 1, %s14
  %s17 = scalar_select 0, %s16, %s14
  $region1: #{tpu_custom_call.1} parent=0
    #allocation2 [shape = 'u8[12288]{0}', space=vmem, size = 0x3000, scoped, tag = 'input window, operand 0, single buffered']
    #allocation3 [shape = 's32[1]{0}', space=sflag, size = 0x4, scoped, tag = 'scoped memory for tpu_custom_call.1']
    #allocation4 [shape = 's32[1]{0}', space=sflag, size = 0x4, scoped, tag = 'scoped memory for tpu_custom_call.1']
    #allocation5 [shape = 'u8[12288]{0}', space=vmem, size = 0x3000, scoped, tag = 'input window, operand 1, single buffered']
    #allocation6 [shape = 's32[1]{0}', space=sflag, size = 0x4, scoped, tag = 'scoped memory for tpu_custom_call.1']
    #allocation7 [shape = 'u8[16384]{0}', space=vmem, size = 0x4000, scoped, tag = 'input window, operand 4, single buffered']
    #allocation8 [shape = 'u8[16384]{0}', space=vmem, size = 0x4000, scoped, tag = 'input window, operand 6, single buffered']
    #allocation9 [shape = 's32[1]{0}', space=sflag, size = 0x4, scoped, tag = 'scoped memory for tpu_custom_call.1']
    #allocation10 [shape = 'u8[16384]{0}', space=vmem, size = 0x4000, scoped, tag = 'input window, operand 8, single buffered']
    #allocation11 [shape = 'u8[12288]{0}', space=vmem, size = 0x3000, scoped, tag = 'output window, operand 0, single buffered']
    #allocation12 [shape = 'u8[12288]{0}', space=vmem, size = 0x3000, scoped, tag = 'output window, operand 1, single buffered']
    #allocation13 [shape = 's32[1]{0}', space=sflag, size = 0x4, scoped, tag = 'scoped memory for tpu_custom_call.1']
    #allocation14 [shape = 'u8[12288]{0}', space=vmem, size = 0x3000, scoped, tag = 'output window, operand 2, single buffered']
    %18 = vsyncpa [#allocation3], 0
    %19 = vsyncpa [#allocation6], 0
    %20 = vsyncpa [#allocation9], 0
    %21 = vsyncpa [#allocation4], 0
    %22 = vsyncpa [#allocation13], 0
    // Predicated region
    $region2: #{tpu_custom_call.1} parent=1 // pred_check
      _
    $region3: #{tpu_custom_call.1} parent=1 // pred_check_branch
      %24 = sbr.rel (0) target = $region5
    $region4: #{tpu_custom_call.1} parent=1 // pred_region
      %s26 = ssub.s32 384, 384
      %27 = vsyncadd [#allocation3], %s26
      %s28 = sshll.u32 [#allocation2], 4
      %s29 = int_to_ptr.vmem [resolvable:$true] %s28
      %34 = dma.hbm_to_vmem [thread:$0]  %s0, 384, %s29, [#allocation3], 128, 128, 8
    $region5: #{tpu_custom_call.1} parent=1 // pred_fallthru
      _
    // Predicated region
    $region6: #{tpu_custom_call.1} parent=1 // pred_check
      _
    $region7: #{tpu_custom_call.1} parent=1 // pred_check_branch
      %36 = sbr.rel (0) target = $region9
    $region8: #{tpu_custom_call.1} parent=1 // pred_region
      %s38 = ssub.s32 384, 384
      %39 = vsyncadd [#allocation6], %s38
      %s40 = sshll.u32 [#allocation5], 4
      %s41 = int_to_ptr.vmem [resolvable:$true] %s40
      %46 = dma.hbm_to_vmem [thread:$0]  %s1, 384, %s41, [#allocation6], 128, 128, 8
    $region9: #{tpu_custom_call.1} parent=1 // pred_fallthru
      _
    // Predicated region
    $region10: #{tpu_custom_call.1} parent=1 // pred_check
      _
    $region11: #{tpu_custom_call.1} parent=1 // pred_check_branch
      %48 = sbr.rel (0) target = $region13
    $region12: #{tpu_custom_call.1} parent=1 // pred_region
      _
    $region13: #{tpu_custom_call.1} parent=1 // pred_fallthru
      _
    // Predicated region
    $region14: #{tpu_custom_call.1} parent=1 // pred_check
      _
    $region15: #{tpu_custom_call.1} parent=1 // pred_check_branch
      %50 = sbr.rel (0) target = $region17
    $region16: #{tpu_custom_call.1} parent=1 // pred_region
      _
    $region17: #{tpu_custom_call.1} parent=1 // pred_fallthru
      _
    // Predicated region
    $region18: #{tpu_custom_call.1} parent=1 // pred_check
      _
    $region19: #{tpu_custom_call.1} parent=1 // pred_check_branch
      %52 = sbr.rel (0) target = $region21
    $region20: #{tpu_custom_call.1} parent=1 // pred_region
      %s54 = ssub.s32 512, 512
      %55 = vsyncadd [#allocation6], %s54
      %s56 = sshll.u32 [#allocation7], 4
      %s57 = int_to_ptr.vmem [resolvable:$true] %s56
      %62 = dma.hbm_to_vmem [thread:$0]  %s4, 512, %s57, [#allocation6], 128, 128, 8
    $region21: #{tpu_custom_call.1} parent=1 // pred_fallthru
      _
    // Predicated region
    $region22: #{tpu_custom_call.1} parent=1 // pred_check
      _
    $region23: #{tpu_custom_call.1} parent=1 // pred_check_branch
      %64 = sbr.rel (0) target = $region25
    $region24: #{tpu_custom_call.1} parent=1 // pred_region
      _
    $region25: #{tpu_custom_call.1} parent=1 // pred_fallthru
      _
    // Predicated region
    $region26: #{tpu_custom_call.1} parent=1 // pred_check
      _
    $region27: #{tpu_custom_call.1} parent=1 // pred_check_branch
      %66 = sbr.rel (0) target = $region29
    $region28: #{tpu_custom_call.1} parent=1 // pred_region
      %s68 = ssub.s32 512, 512
      %69 = vsyncadd [#allocation9], %s68
      %s70 = sshll.u32 [#allocation8], 4
      %s71 = int_to_ptr.vmem [resolvable:$true] %s70
      %76 = dma.hbm_to_vmem [thread:$0]  %s6, 512, %s71, [#allocation9], 128, 128, 8
    $region29: #{tpu_custom_call.1} parent=1 // pred_fallthru
      _
    // Predicated region
    $region30: #{tpu_custom_call.1} parent=1 // pred_check
      _
    $region31: #{tpu_custom_call.1} parent=1 // pred_check_branch
      %78 = sbr.rel (0) target = $region33
    $region32: #{tpu_custom_call.1} parent=1 // pred_region
      _
    $region33: #{tpu_custom_call.1} parent=1 // pred_fallthru
      _
    // Predicated region
    $region34: #{tpu_custom_call.1} parent=1 // pred_check
      _
    $region35: #{tpu_custom_call.1} parent=1 // pred_check_branch
      %80 = sbr.rel (0) target = $region37
    $region36: #{tpu_custom_call.1} parent=1 // pred_region
      %s82 = ssub.s32 512, 512
      %83 = vsyncadd [#allocation9], %s82
      %s84 = sshll.u32 [#allocation10], 4
      %s85 = int_to_ptr.vmem [resolvable:$true] %s84
      %90 = dma.hbm_to_vmem [thread:$0]  %s8, 512, %s85, [#allocation9], 128, 128, 8
    $region37: #{tpu_custom_call.1} parent=1 // pred_fallthru
      _
    // Predicated region
    $region38: #{tpu_custom_call.1} parent=1 // pred_check
      _
    $region39: #{tpu_custom_call.1} parent=1 // pred_check_branch
      %92 = sbr.rel (0) target = $region41
    $region40: #{tpu_custom_call.1} parent=1 // pred_region
      _
    $region41: #{tpu_custom_call.1} parent=1 // pred_fallthru
      _
    // Predicated region
    $region42: #{tpu_custom_call.1} parent=1 // pred_check
      _
    $region43: #{tpu_custom_call.1} parent=1 // pred_check_branch
      %94 = sbr.rel (0) target = $region45
    $region44: #{tpu_custom_call.1} parent=1 // pred_region
      %95 = dma.done [#allocation3], 384
    $region45: #{tpu_custom_call.1} parent=1 // pred_fallthru
      _
    // Predicated region
    $region46: #{tpu_custom_call.1} parent=1 // pred_check
      _
    $region47: #{tpu_custom_call.1} parent=1 // pred_check_branch
      %97 = sbr.rel (0) target = $region49
    $region48: #{tpu_custom_call.1} parent=1 // pred_region
      %98 = dma.done [#allocation6], 384
    $region49: #{tpu_custom_call.1} parent=1 // pred_fallthru
      _
    // Predicated region
    $region50: #{tpu_custom_call.1} parent=1 // pred_check
      _
    $region51: #{tpu_custom_call.1} parent=1 // pred_check_branch
      %100 = sbr.rel (0) target = $region53
    $region52: #{tpu_custom_call.1} parent=1 // pred_region
      %101 = dma.done [#allocation6], 512
    $region53: #{tpu_custom_call.1} parent=1 // pred_fallthru
      _
    // Predicated region
    $region54: #{tpu_custom_call.1} parent=1 // pred_check
      _
    $region55: #{tpu_custom_call.1} parent=1 // pred_check_branch
      %103 = sbr.rel (0) target = $region57
    $region56: #{tpu_custom_call.1} parent=1 // pred_region
      %104 = dma.done [#allocation9], 512
    $region57: #{tpu_custom_call.1} parent=1 // pred_fallthru
      _
    // Predicated region
    $region58: #{tpu_custom_call.1} parent=1 // pred_check
      _
    $region59: #{tpu_custom_call.1} parent=1 // pred_check_branch
      %106 = sbr.rel (0) target = $region61
    $region60: #{tpu_custom_call.1} parent=1 // pred_region
      %107 = dma.done [#allocation9], 512
    $region61: #{tpu_custom_call.1} parent=1 // pred_fallthru
      _
    %v108 = vld [vmem:[#allocation2] sm:$0xff]
    %v109 = vld [vmem:[#allocation2 + $0x8] sm:$0xff]
    %v110 = vld [vmem:[#allocation2 + $0x10] sm:$0xff]
    %v111 = vld [vmem:[%s2] sm:$0x1]
    %v112 = vld [vmem:[%s3] sm:$0x1]
    %vm113 = vcmask 261120
    %v114 = vsel %vm113, %v108, 0.0
    %115 = vadd.xlane.f32.xlu0 %v114
    %v116 = vpop.xlane.xlu0 %115
    %v117 = vsel %vm113, %v109, 0.0
    %118 = vadd.xlane.f32.xlu0 %v117
    %v119 = vpop.xlane.xlu0 %118
    %v120 = vsel %vm113, %v110, 0.0
    %121 = vadd.xlane.f32.xlu0 %v120
    %v122 = vpop.xlane.xlu0 %121
    %v123 = vrcp.pop 32.0
    %v124 = vmul.f32 %v116, %v123
    %v125 = vmul.f32 %v119, %v123
    %v126 = vmul.f32 %v122, %v123
    %v127 = vsub.f32 %v108, %v124
    %v128 = vsub.f32 %v109, %v125
    %v129 = vsub.f32 %v110, %v126
    %v130 = vmul.f32 %v127, %v127
    %v131 = vmul.f32 %v128, %v128
    %v132 = vmul.f32 %v129, %v129
    %v133 = vsel %vm113, %v130, 0.0
    %134 = vadd.xlane.f32.xlu0 %v133
    %v135 = vpop.xlane.xlu0 %134
    %v136 = vsel %vm113, %v131, 0.0
    %137 = vadd.xlane.f32.xlu0 %v136
    %v138 = vpop.xlane.xlu0 %137
    %v139 = vsel %vm113, %v132, 0.0
    %140 = vadd.xlane.f32.xlu0 %v139
    %v141 = vpop.xlane.xlu0 %140
    %v142 = vmul.f32 %v135, %v123
    %v143 = vmul.f32 %v138, %v123
    %v144 = vmul.f32 %v141, %v123
    %v145 = vadd.f32 %v142, 1e-05
    %v146 = vadd.f32 %v143, 1e-05
    %v147 = vadd.f32 %v144, 1e-05
    %v148 = vrsqrt.pop %v145
    %v149 = vrsqrt.pop %v146
    %v150 = vrsqrt.pop %v147
    %v151 = vmul.f32 %v127, %v148
    %v152 = vmul.f32 %v128, %v149
    %v153 = vmul.f32 %v129, %v150
    %v155 = vlaneseq
    %v156 = vshrl.u32 %v155, 7
    %v157 = vsub.s32 0, %v156
    %v158 = vrot.slane %v111, %v157
    %v160 = vmul.f32 %v151, %v158
    %v161 = vmul.f32 %v152, %v158
    %v162 = vmul.f32 %v153, %v158
    %v164 = vlaneseq
    %v165 = vshrl.u32 %v164, 7
    %v166 = vsub.s32 0, %v165
    %v167 = vrot.slane %v112, %v166
    %v169 = vadd.f32 %v160, %v167
    %v170 = vadd.f32 %v161, %v167
    %v171 = vadd.f32 %v162, %v167
    %v172 = vld [vmem:[#allocation5] sm:$0xff]
    %v173 = vld [vmem:[#allocation5 + $0x8] sm:$0xff]
    %v174 = vld [vmem:[#allocation5 + $0x10] sm:$0xff]
    %v175 = vadd.f32 %v169, %v172
    %v176 = vadd.f32 %v170, %v173
    %v177 = vadd.f32 %v171, %v174
    %v178 = vld [vmem:[#allocation7] sm:$0xff]
    %v179 = vld [vmem:[#allocation7 + $0x8] sm:$0xff]
    %v180 = vld [vmem:[#allocation7 + $0x10] sm:$0xff]
    %v181 = vld [vmem:[#allocation7 + $0x18] sm:$0xff]
    %v182 = vld [vmem:[%s5] sm:$0x1]
    %v184 = vlaneseq
    %v185 = vshrl.u32 %v184, 7
    %v186 = vsub.s32 0, %v185
    %v187 = vrot.slane %v182, %v186
    %v190 = vsel %vm113, %v175, 0
    %v193 = vsel %vm113, %v176, 0
    %v196 = vsel %vm113, %v177, 0
    %198 = vmatprep.subr.mxu0 0.0
    %199 = vmatpush1.msra.mxu0 %v178
    %200 = vmatprep.subr.mxu0 0.0
    %201 = vmatpush1.msra.mxu0 %v179
    %202 = vmatprep.subr.mxu0 0.0
    %203 = vmatpush1.msra.mxu0 %v180
    %204 = vmatprep.subr.mxu0 0.0
    %205 = vmatpush1.msra.mxu0 %v181
    %206 = vmatprep.subr.mxu0 0.0
    %207 = vmatpush1.msra.mxu0 0.0
    %208 = vmatprep.subr.mxu0 0.0
    %209 = vmatpush1.msra.mxu0 0.0
    %210 = vmatprep.subr.mxu0 0.0
    %211 = vmatpush1.msra.mxu0 0.0
    %212 = vmatprep.subr.mxu0 0.0
    %213 = vmatpush1.msra.mxu0 0.0
    %214 = vmatprep.subr.mxu0 0.0
    %215 = vmatpush1.msra.mxu0 0.0
    %216 = vmatprep.subr.mxu0 0.0
    %217 = vmatpush1.msra.mxu0 0.0
    %218 = vmatprep.subr.mxu0 0.0
    %219 = vmatpush1.msra.mxu0 0.0
    %220 = vmatprep.subr.mxu0 0.0
    %221 = vmatpush1.msra.mxu0 0.0
    %222 = vmatprep.subr.mxu0 0.0
    %223 = vmatpush1.msra.mxu0 0.0
    %224 = vmatprep.subr.mxu0 0.0
    %225 = vmatpush1.msra.mxu0 0.0
    %226 = vmatprep.subr.mxu0 0.0
    %227 = vmatpush1.msra.mxu0 0.0
    %228 = vmatprep.subr.mxu0 0.0
    %229 = vmatpush1.msra.mxu0 0.0
    %230 = vmatprep.subr.mxu0 0.0
    %231 = vmatpush1.msra.mxu0 0.0
    %232 = vmatprep.subr.mxu0 0.0
    %233 = vmatpush1.msra.mxu0 0.0
    %234 = vmatprep.subr.mxu0 0.0
    %235 = vmatpush1.msra.mxu0 0.0
    %236 = vmatprep.subr.mxu0 0.0
    %237 = vmatpush1.msra.mxu0 0.0
    %238 = vmatprep.subr.mxu0 0.0
    %239 = vmatpush1.msra.mxu0 0.0
    %240 = vmatprep.subr.mxu0 0.0
    %241 = vmatpush1.msra.mxu0 0.0
    %242 = vmatprep.subr.mxu0 0.0
    %243 = vmatpush1.msra.mxu0 0.0
    %244 = vmatprep.subr.mxu0 0.0
    %245 = vmatpush1.msra.mxu0 0.0
    %246 = vmatprep.subr.mxu0 0.0
    %247 = vmatpush1.msra.mxu0 0.0
    %248 = vmatprep.subr.mxu0 0.0
    %249 = vmatpush1.msra.mxu0 0.0
    %250 = vmatprep.subr.mxu0 0.0
    %251 = vmatpush1.msra.mxu0 0.0
    %252 = vmatprep.subr.mxu0 0.0
    %253 = vmatpush1.msra.mxu0 0.0
    %254 = vmatprep.subr.mxu0 0.0
    %255 = vmatpush1.msra.mxu0 0.0
    %256 = vmatprep.subr.mxu0 0.0
    %257 = vmatpush1.msra.mxu0 0.0
    %258 = vmatprep.subr.mxu0 0.0
    %259 = vmatpush1.msra.mxu0 0.0
    %260 = vmatprep.subr.mxu0 0.0
    %261 = vmatpush1.msra.mxu0 0.0
    %262 = vmatprep.mubr.f32.mxu0 0.0
    %263 = vmatmul.mubr.f32.gmra.mrb[0].mxu0 %v190
    %v264 = vpop.f32.mrb[0].mxu0
    %v265 = vadd.f32 %v187, %v264
    %v266 = vpop.f32.mrb[0].mxu0
    %267 = vmatprep.mubr.f32.mxu0 0.0
    %268 = vmatmul.mubr.f32.gmra.mrb[0].mxu0 %v193
    %v269 = vpop.f32.mrb[0].mxu0
    %v270 = vadd.f32 %v187, %v269
    %v271 = vpop.f32.mrb[0].mxu0
    %272 = vmatprep.mubr.f32.mxu0 0.0
    %273 = vmatmul.mubr.f32.gmra.mrb[0].mxu0 %v196
    %v274 = vpop.f32.mrb[0].mxu0
    %v275 = vadd.f32 %v187, %v274
    %v276 = vpop.f32.mrb[0].mxu0
    %277 = vdwg.mxu0
    %278 = vst.msk [vmem:[#allocation11] sm:$0xff] %vm113, %v265
    %279 = vst.msk [vmem:[#allocation11 + $0x8] sm:$0xff] %vm113, %v270
    %280 = vst.msk [vmem:[#allocation11 + $0x10] sm:$0xff] %vm113, %v275
    %v281 = vld [vmem:[#allocation8] sm:$0xff]
    %v282 = vld [vmem:[#allocation8 + $0x8] sm:$0xff]
    %v283 = vld [vmem:[#allocation8 + $0x10] sm:$0xff]
    %v284 = vld [vmem:[#allocation8 + $0x18] sm:$0xff]
    %v285 = vld [vmem:[%s7] sm:$0x1]
    %v287 = vlaneseq
    %v288 = vshrl.u32 %v287, 7
    %v289 = vsub.s32 0, %v288
    %v290 = vrot.slane %v285, %v289
    %292 = vmatprep.subr.mxu0 0.0
    %293 = vmatpush1.msra.mxu0 %v281
    %294 = vmatprep.subr.mxu0 0.0
    %295 = vmatpush1.msra.mxu0 %v282
    %296 = vmatprep.subr.mxu0 0.0
    %297 = vmatpush1.msra.mxu0 %v283
    %298 = vmatprep.subr.mxu0 0.0
    %299 = vmatpush1.msra.mxu0 %v284
    %300 = vmatprep.subr.mxu0 0.0
    %301 = vmatpush1.msra.mxu0 0.0
    %302 = vmatprep.subr.mxu0 0.0
    %303 = vmatpush1.msra.mxu0 0.0
    %304 = vmatprep.subr.mxu0 0.0
    %305 = vmatpush1.msra.mxu0 0.0
    %306 = vmatprep.subr.mxu0 0.0
    %307 = vmatpush1.msra.mxu0 0.0
    %308 = vmatprep.subr.mxu0 0.0
    %309 = vmatpush1.msra.mxu0 0.0
    %310 = vmatprep.subr.mxu0 0.0
    %311 = vmatpush1.msra.mxu0 0.0
    %312 = vmatprep.subr.mxu0 0.0
    %313 = vmatpush1.msra.mxu0 0.0
    %314 = vmatprep.subr.mxu0 0.0
    %315 = vmatpush1.msra.mxu0 0.0
    %316 = vmatprep.subr.mxu0 0.0
    %317 = vmatpush1.msra.mxu0 0.0
    %318 = vmatprep.subr.mxu0 0.0
    %319 = vmatpush1.msra.mxu0 0.0
    %320 = vmatprep.subr.mxu0 0.0
    %321 = vmatpush1.msra.mxu0 0.0
    %322 = vmatprep.subr.mxu0 0.0
    %323 = vmatpush1.msra.mxu0 0.0
    %324 = vmatprep.subr.mxu0 0.0
    %325 = vmatpush1.msra.mxu0 0.0
    %326 = vmatprep.subr.mxu0 0.0
    %327 = vmatpush1.msra.mxu0 0.0
    %328 = vmatprep.subr.mxu0 0.0
    %329 = vmatpush1.msra.mxu0 0.0
    %330 = vmatprep.subr.mxu0 0.0
    %331 = vmatpush1.msra.mxu0 0.0
    %332 = vmatprep.subr.mxu0 0.0
    %333 = vmatpush1.msra.mxu0 0.0
    %334 = vmatprep.subr.mxu0 0.0
    %335 = vmatpush1.msra.mxu0 0.0
    %336 = vmatprep.subr.mxu0 0.0
    %337 = vmatpush1.msra.mxu0 0.0
    %338 = vmatprep.subr.mxu0 0.0
    %339 = vmatpush1.msra.mxu0 0.0
    %340 = vmatprep.subr.mxu0 0.0
    %341 = vmatpush1.msra.mxu0 0.0
    %342 = vmatprep.subr.mxu0 0.0
    %343 = vmatpush1.msra.mxu0 0.0
    %344 = vmatprep.subr.mxu0 0.0
    %345 = vmatpush1.msra.mxu0 0.0
    %346 = vmatprep.subr.mxu0 0.0
    %347 = vmatpush1.msra.mxu0 0.0
    %348 = vmatprep.subr.mxu0 0.0
    %349 = vmatpush1.msra.mxu0 0.0
    %350 = vmatprep.subr.mxu0 0.0
    %351 = vmatpush1.msra.mxu0 0.0
    %352 = vmatprep.subr.mxu0 0.0
    %353 = vmatpush1.msra.mxu0 0.0
    %354 = vmatprep.subr.mxu0 0.0
    %355 = vmatpush1.msra.mxu0 0.0
    %356 = vmatprep.mubr.f32.mxu0 0.0
    %357 = vmatmul.mubr.f32.gmra.mrb[0].mxu0 %v190
    %v358 = vpop.f32.mrb[0].mxu0
    %v359 = vadd.f32 %v290, %v358
    %v360 = vpop.f32.mrb[0].mxu0
    %361 = vmatprep.mubr.f32.mxu0 0.0
    %362 = vmatmul.mubr.f32.gmra.mrb[0].mxu0 %v193
    %v363 = vpop.f32.mrb[0].mxu0
    %v364 = vadd.f32 %v290, %v363
    %v365 = vpop.f32.mrb[0].mxu0
    %366 = vmatprep.mubr.f32.mxu0 0.0
    %367 = vmatmul.mubr.f32.gmra.mrb[0].mxu0 %v196
    %v368 = vpop.f32.mrb[0].mxu0
    %v369 = vadd.f32 %v290, %v368
    %v370 = vpop.f32.mrb[0].mxu0
    %371 = vdwg.mxu0
    %372 = vst.msk [vmem:[#allocation12] sm:$0xff] %vm113, %v359
    %373 = vst.msk [vmem:[#allocation12 + $0x8] sm:$0xff] %vm113, %v364
    %374 = vst.msk [vmem:[#allocation12 + $0x10] sm:$0xff] %vm113, %v369
    %v375 = vld [vmem:[#allocation10] sm:$0xff]
    %v376 = vld [vmem:[#allocation10 + $0x8] sm:$0xff]
    %v377 = vld [vmem:[#allocation10 + $0x10] sm:$0xff]
    %v378 = vld [vmem:[#allocation10 + $0x18] sm:$0xff]
    %v379 = vld [vmem:[%s9] sm:$0x1]
    %v381 = vlaneseq
    %v382 = vshrl.u32 %v381, 7
    %v383 = vsub.s32 0, %v382
    %v384 = vrot.slane %v379, %v383
    %386 = vmatprep.subr.mxu0 0.0
    %387 = vmatpush1.msra.mxu0 %v375
    %388 = vmatprep.subr.mxu0 0.0
    %389 = vmatpush1.msra.mxu0 %v376
    %390 = vmatprep.subr.mxu0 0.0
    %391 = vmatpush1.msra.mxu0 %v377
    %392 = vmatprep.subr.mxu0 0.0
    %393 = vmatpush1.msra.mxu0 %v378
    %394 = vmatprep.subr.mxu0 0.0
    %395 = vmatpush1.msra.mxu0 0.0
    %396 = vmatprep.subr.mxu0 0.0
    %397 = vmatpush1.msra.mxu0 0.0
    %398 = vmatprep.subr.mxu0 0.0
    %399 = vmatpush1.msra.mxu0 0.0
    %400 = vmatprep.subr.mxu0 0.0
    %401 = vmatpush1.msra.mxu0 0.0
    %402 = vmatprep.subr.mxu0 0.0
    %403 = vmatpush1.msra.mxu0 0.0
    %404 = vmatprep.subr.mxu0 0.0
    %405 = vmatpush1.msra.mxu0 0.0
    %406 = vmatprep.subr.mxu0 0.0
    %407 = vmatpush1.msra.mxu0 0.0
    %408 = vmatprep.subr.mxu0 0.0
    %409 = vmatpush1.msra.mxu0 0.0
    %410 = vmatprep.subr.mxu0 0.0
    %411 = vmatpush1.msra.mxu0 0.0
    %412 = vmatprep.subr.mxu0 0.0
    %413 = vmatpush1.msra.mxu0 0.0
    %414 = vmatprep.subr.mxu0 0.0
    %415 = vmatpush1.msra.mxu0 0.0
    %416 = vmatprep.subr.mxu0 0.0
    %417 = vmatpush1.msra.mxu0 0.0
    %418 = vmatprep.subr.mxu0 0.0
    %419 = vmatpush1.msra.mxu0 0.0
    %420 = vmatprep.subr.mxu0 0.0
    %421 = vmatpush1.msra.mxu0 0.0
    %422 = vmatprep.subr.mxu0 0.0
    %423 = vmatpush1.msra.mxu0 0.0
    %424 = vmatprep.subr.mxu0 0.0
    %425 = vmatpush1.msra.mxu0 0.0
    %426 = vmatprep.subr.mxu0 0.0
    %427 = vmatpush1.msra.mxu0 0.0
    %428 = vmatprep.subr.mxu0 0.0
    %429 = vmatpush1.msra.mxu0 0.0
    %430 = vmatprep.subr.mxu0 0.0
    %431 = vmatpush1.msra.mxu0 0.0
    %432 = vmatprep.subr.mxu0 0.0
    %433 = vmatpush1.msra.mxu0 0.0
    %434 = vmatprep.subr.mxu0 0.0
    %435 = vmatpush1.msra.mxu0 0.0
    %436 = vmatprep.subr.mxu0 0.0
    %437 = vmatpush1.msra.mxu0 0.0
    %438 = vmatprep.subr.mxu0 0.0
    %439 = vmatpush1.msra.mxu0 0.0
    %440 = vmatprep.subr.mxu0 0.0
    %441 = vmatpush1.msra.mxu0 0.0
    %442 = vmatprep.subr.mxu0 0.0
    %443 = vmatpush1.msra.mxu0 0.0
    %444 = vmatprep.subr.mxu0 0.0
    %445 = vmatpush1.msra.mxu0 0.0
    %446 = vmatprep.subr.mxu0 0.0
    %447 = vmatpush1.msra.mxu0 0.0
    %448 = vmatprep.subr.mxu0 0.0
    %449 = vmatpush1.msra.mxu0 0.0
    %450 = vmatprep.mubr.f32.mxu0 0.0
    %451 = vmatmul.mubr.f32.gmra.mrb[0].mxu0 %v190
    %v452 = vpop.f32.mrb[0].mxu0
    %v453 = vadd.f32 %v384, %v452
    %v454 = vpop.f32.mrb[0].mxu0
    %455 = vmatprep.mubr.f32.mxu0 0.0
    %456 = vmatmul.mubr.f32.gmra.mrb[0].mxu0 %v193
    %v457 = vpop.f32.mrb[0].mxu0
    %v458 = vadd.f32 %v384, %v457
    %v459 = vpop.f32.mrb[0].mxu0
    %460 = vmatprep.mubr.f32.mxu0 0.0
    %461 = vmatmul.mubr.f32.gmra.mrb[0].mxu0 %v196
    %v462 = vpop.f32.mrb[0].mxu0
    %v463 = vadd.f32 %v384, %v462
    %v464 = vpop.f32.mrb[0].mxu0
    %465 = vdwg.mxu0
    %466 = vst.msk [vmem:[#allocation14] sm:$0xff] %vm113, %v453
    %467 = vst.msk [vmem:[#allocation14 + $0x8] sm:$0xff] %vm113, %v458
    %468 = vst.msk [vmem:[#allocation14 + $0x10] sm:$0xff] %vm113, %v463
    // Predicated region
    $region62: #{tpu_custom_call.1} parent=1 // pred_check
      _
    $region63: #{tpu_custom_call.1} parent=1 // pred_check_branch
      %470 = sbr.rel (0) target = $region65
    $region64: #{tpu_custom_call.1} parent=1 // pred_region
      %s472 = ssub.s32 384, 384
      %473 = vsyncadd [#allocation4], %s472
      %s474 = sshll.u32 [#allocation11], 4
      %s475 = int_to_ptr.vmem [resolvable:$true] %s474
      %480 = dma.vmem_to_hbm [thread:$0]  %s475, 384, %s10, [#allocation4], 128, 128, 8
    $region65: #{tpu_custom_call.1} parent=1 // pred_fallthru
      _
    // Predicated region
    $region66: #{tpu_custom_call.1} parent=1 // pred_check
      _
    $region67: #{tpu_custom_call.1} parent=1 // pred_check_branch
      %482 = sbr.rel (0) target = $region69
    $region68: #{tpu_custom_call.1} parent=1 // pred_region
      %s484 = ssub.s32 384, 384
      %485 = vsyncadd [#allocation13], %s484
      %s486 = sshll.u32 [#allocation12], 4
      %s487 = int_to_ptr.vmem [resolvable:$true] %s486
      %492 = dma.vmem_to_hbm [thread:$0]  %s487, 384, %s11, [#allocation13], 128, 128, 8
    $region69: #{tpu_custom_call.1} parent=1 // pred_fallthru
      _
    // Predicated region
    $region70: #{tpu_custom_call.1} parent=1 // pred_check
      _
    $region71: #{tpu_custom_call.1} parent=1 // pred_check_branch
      %494 = sbr.rel (0) target = $region73
    $region72: #{tpu_custom_call.1} parent=1 // pred_region
      %s496 = ssub.s32 384, 384
      %497 = vsyncadd [#allocation13], %s496
      %s498 = sshll.u32 [#allocation14], 4
      %s499 = int_to_ptr.vmem [resolvable:$true] %s498
      %504 = dma.vmem_to_hbm [thread:$0]  %s499, 384, %s12, [#allocation13], 128, 128, 8
    $region73: #{tpu_custom_call.1} parent=1 // pred_fallthru
      _
    // Predicated region
    $region74: #{tpu_custom_call.1} parent=1 // pred_check
      _
    $region75: #{tpu_custom_call.1} parent=1 // pred_check_branch
      %506 = sbr.rel (0) target = $region77
    $region76: #{tpu_custom_call.1} parent=1 // pred_region
      %507 = dma.done [#allocation4], 384
    $region77: #{tpu_custom_call.1} parent=1 // pred_fallthru
      _
    // Predicated region
    $region78: #{tpu_custom_call.1} parent=1 // pred_check
      _
    $region79: #{tpu_custom_call.1} parent=1 // pred_check_branch
      %509 = sbr.rel (0) target = $region81
    $region80: #{tpu_custom_call.1} parent=1 // pred_region
      %510 = dma.done [#allocation13], 384
    $region81: #{tpu_custom_call.1} parent=1 // pred_fallthru
      _
    // Predicated region
    $region82: #{tpu_custom_call.1} parent=1 // pred_check
      _
    $region83: #{tpu_custom_call.1} parent=1 // pred_check_branch
      %512 = sbr.rel (0) target = $region85
    $region84: #{tpu_custom_call.1} parent=1 // pred_region
      %513 = dma.done [#allocation13], 384
    $region85: #{tpu_custom_call.1} parent=1 // pred_fallthru
      _
    %514 = vsyncpa [#allocation3], 1
    %515 = vsyncpa [#allocation6], 1
    %516 = vsyncpa [#allocation9], 1
    %517 = vsyncpa [#allocation4], 1
    %518 = vsyncpa [#allocation13], 1

</llo_original>
